<compile_context>
chip_gen: v7x
topology: tpu7x:2x2x1
jax: 0.10.0
libtpu: 0.0.40
codegen_flags: <defaults>
</compile_context>

<pallas_src>
import functools
import math

import jax
import jax.numpy as jnp
from jax.experimental import pallas as pl
from jax.experimental.pallas import tpu as pltpu

LAMBDA_NOOBJ = 1.3
LAMBDA_OBJ = 1.0
LAMBDA_CLASS = 3.3
LAMBDA_COORD = 6.0


def _round_up(x, m):
    return (x + m - 1) // m * m


def _bce_with_logits(x, z):
    # numerically stable BCEWithLogits, elementwise (same formula as torch)
    return jnp.maximum(x, 0.0) - x * z + jnp.log(1.0 + jnp.exp(-jnp.abs(x)))


def _yolo_loss_kernel(p_ref, t_ref, out_ref, acc_ref, *, n_cells, ncols_pad):
    """p_ref/t_ref: (C, 8, bc8) blocks.  acc_ref: (6, 8, bc8) f32 scratch.

    acc rows: 0 noobj-bce-sum, 1 obj-bce-sum, 2 noobj-count, 3 obj-count,
              4 coord squared-error sum, 5 class cross-entropy sum.
    """
    h = pl.program_id(0)            # split index (TensorCore on v7x)
    i = pl.program_id(1)            # column block within the split
    nb = pl.num_programs(1)
    bc8 = p_ref.shape[2]

    @pl.when(i == 0)
    def _():
        acc_ref[...] = jnp.zeros_like(acc_ref)

    # ---- validity mask for padded cells (replaces any wrapper-side mask) ---
    row = jax.lax.broadcasted_iota(jnp.int32, (8, bc8), 0)
    col = jax.lax.broadcasted_iota(jnp.int32, (8, bc8), 1)
    col0 = (h * nb + i) * bc8
    valid = (row * ncols_pad + col0 + col) < n_cells            # (8, bc8)

    # ---- objectness BCE-with-logits ----------------------------------------
    t4 = t_ref[4].astype(jnp.float32)                           # (8, bc8)
    p4 = p_ref[4].astype(jnp.float32)
    tc = jnp.where(valid, t4, -1.0)     # padded cells: neither obj nor noobj
    pc = jnp.where(valid, p4, 0.0)      # keep padded logits out of BCE
    obj_b = tc == 1.0
    objf = obj_b.astype(jnp.float32)
    noobjf = (tc == 0.0).astype(jnp.float32)

    bce = _bce_with_logits(pc, tc)
    acc_ref[0] += noobjf * bce
    acc_ref[1] += objf * bce
    acc_ref[2] += noobjf
    acc_ref[3] += objf

    # ---- coordinate MSE on [sigmoid(x,y), exp(w,h)] (object cells only) ----
    # Mask BEFORE the nonlinearities so non-object / padded logits cannot
    # overflow to inf and poison the masked sum (0 * inf == NaN).
    pxy = jnp.where(obj_b, p_ref[0:2].astype(jnp.float32), 0.0)     # (2,8,bc8)
    pwh = jnp.where(obj_b, p_ref[2:4].astype(jnp.float32), 0.0)
    txy = jnp.where(obj_b, t_ref[0:2].astype(jnp.float32), 0.0)
    twh = jnp.where(obj_b, t_ref[2:4].astype(jnp.float32), 0.0)
    se = (jax.nn.sigmoid(pxy) - txy) ** 2 + (jnp.exp(pwh) - twh) ** 2
    acc_ref[4] += objf * (se[0] + se[1])

    # ---- soft-label cross entropy on class logits (object cells only) ------
    logits = jnp.where(obj_b, p_ref[5:].astype(jnp.float32), 0.0)   # (NC,8,bc8)
    tcls = jnp.where(obj_b, t_ref[5:].astype(jnp.float32), 0.0)
    m = jnp.max(logits, axis=0)                                      # (8, bc8)
    lse = m + jnp.log(jnp.sum(jnp.exp(logits - m), axis=0))
    acc_ref[5] += objf * jnp.sum(tcls * (lse - logits), axis=0)

    # ---- finalize: one cross-lane reduce per split, partial sums to HBM ----
    @pl.when(i == nb - 1)
    def _():
        lane = jax.lax.broadcasted_iota(jnp.int32, (1, 1, 128), 2)
        out = jnp.zeros((1, 1, 128), jnp.float32)
        for k in range(6):
            s = jnp.sum(acc_ref[k], axis=(0, 1), keepdims=True)     # (1, 1)
            out = out + jnp.where(lane == k, s, 0.0)
        out_ref[...] = out


def yolo_v2_loss(predictions, targets, *, max_block_cols=None):
    """Scalar YOLOv2 loss. predictions/targets: [..., 5 + num_classes]."""
    assert predictions.shape == targets.shape
    C = predictions.shape[-1]
    assert C > 5, "expect layout [x, y, w, h, conf, classes...]"
    N = math.prod(predictions.shape[:-1])
    p_item = jnp.dtype(predictions.dtype).itemsize
    t_item = jnp.dtype(targets.dtype).itemsize

    # ---- VMEM-budget-derived block size (generation aware) -----------------
    try:
        vmem_cap = int(pltpu.get_tpu_info().vmem_capacity_bytes)
    except Exception:
        vmem_cap = 64 << 20                      # v7x-safe fallback
    vmem_cap = max(vmem_cap, 32 << 20)
    usable = (2 * vmem_cap) // 3                 # ~42 MiB v7x / ~85 MiB v5e,v6e
    # bytes per lane-column: 2x double-buffered inputs (C x 8 rows) + packed acc
    per_col = 2 * C * 8 * (p_item + t_item) + 6 * 8 * 4
    budget_cols = max(128, (usable - (2 << 20)) // per_col // 128 * 128)
    if max_block_cols is not None:
        budget_cols = max(128, min(budget_cols, _round_up(max_block_cols, 128)))

    # ---- (C, 8, ncols) dense layout, 2-way column split (no OOB blocks) ----
    n_split = 2          # leading "parallel" axis: both TCs on v7x, no-op 1-TC
    ncols = pl.cdiv(N, 8)                        # lane columns needed
    half = pl.cdiv(ncols, n_split)
    nb = pl.cdiv(half, budget_cols)              # column blocks per split
    bc8 = _round_up(pl.cdiv(half, nb), 128)      # balanced block width
    ncols_pad = n_split * nb * bc8               # exact grid coverage
    n_pad = 8 * ncols_pad

    p = jnp.moveaxis(predictions, -1, 0).reshape(C, N)
    t = jnp.moveaxis(targets, -1, 0).reshape(C, N)
    if n_pad != N:
        p = jnp.pad(p, ((0, 0), (0, n_pad - N)))
        t = jnp.pad(t, ((0, 0), (0, n_pad - N)))
    p = p.reshape(C, 8, ncols_pad)
    t = t.reshape(C, 8, ncols_pad)

    need = 2 * C * 8 * bc8 * (p_item + t_item) + 6 * 8 * bc8 * 4 + (1 << 20)
    vmem_limit = int(min(max(need + (2 << 20), 16 << 20), vmem_cap - (4 << 20)))

    n_classes = C - 5
    cost = pl.CostEstimate(
        flops=int(70 * N),
        transcendentals=int((6 + n_classes) * N),
        bytes_accessed=int(C * N * (p_item + t_item)),
    )

    kernel = functools.partial(_yolo_loss_kernel, n_cells=N, ncols_pad=ncols_pad)
    in_idx = lambda h, i: (0, 0, h * nb + i)

    partial_sums = pl.pallas_call(
        kernel,
        out_shape=jax.ShapeDtypeStruct((n_split, 1, 128), jnp.float32),
        grid_spec=pltpu.PrefetchScalarGridSpec(
            num_scalar_prefetch=0,
            grid=(n_split, nb),
            in_specs=[pl.BlockSpec((C, 8, bc8), in_idx),
                      pl.BlockSpec((C, 8, bc8), in_idx)],
            out_specs=pl.BlockSpec((1, 1, 128), lambda h, i: (h, 0, 0)),
            scratch_shapes=[pltpu.VMEM((6, 8, bc8), jnp.float32)],
        ),
        compiler_params=pltpu.CompilerParams(
            dimension_semantics=("parallel", "arbitrary"),
            vmem_limit_bytes=vmem_limit,
            allow_input_fusion=[True, True]),
        cost_estimate=cost,
    )(p, t)

    # ---- tiny epilogue: cross-split sum + count-guarded means --------------
    s = jnp.sum(partial_sums[:, 0, :], axis=0)                 # (128,)
    s_no, s_ob, n_no, n_ob, s_cd, s_cl = s[0], s[1], s[2], s[3], s[4], s[5]
    noobj_loss = jnp.where(n_no > 0, s_no / jnp.maximum(n_no, 1.0), 0.0)
    obj_loss = jnp.where(n_ob > 0, s_ob / jnp.maximum(n_ob, 1.0), 0.0)
    coord_loss = jnp.where(n_ob > 0, s_cd / jnp.maximum(4.0 * n_ob, 1.0), 0.0)
    class_loss = jnp.where(n_ob > 0, s_cl / jnp.maximum(n_ob, 1.0), 0.0)
    return (LAMBDA_COORD * coord_loss + LAMBDA_NOOBJ * noobj_loss
            + LAMBDA_OBJ * obj_loss + LAMBDA_CLASS * class_loss)


def _reference_loss(predictions, targets):
    """Pure-JAX reference mirroring the PyTorch module semantics."""
    C = predictions.shape[-1]
    p = predictions.reshape(-1, C).astype(jnp.float32)
    t = targets.reshape(-1, C).astype(jnp.float32)
    obj = t[:, 4] == 1.0
    noobj = t[:, 4] == 0.0
    n_obj = jnp.sum(obj.astype(jnp.float32))
    n_noobj = jnp.sum(noobj.astype(jnp.float32))

    bce = _bce_with_logits(p[:, 4], t[:, 4])
    noobj_loss = jnp.where(
        n_noobj > 0,
        jnp.sum(jnp.where(noobj, bce, 0.0)) / jnp.maximum(n_noobj, 1.0), 0.0)
    obj_loss = jnp.where(
        n_obj > 0,
        jnp.sum(jnp.where(obj, bce, 0.0)) / jnp.maximum(n_obj, 1.0), 0.0)

    xy = jax.nn.sigmoid(p[:, 0:2])
    wh = jnp.exp(p[:, 2:4])
    se = jnp.sum((xy - t[:, 0:2]) ** 2 + (wh - t[:, 2:4]) ** 2, axis=-1)
    coord_loss = jnp.where(
        n_obj > 0,
        jnp.sum(jnp.where(obj, se, 0.0)) / jnp.maximum(4.0 * n_obj, 1.0), 0.0)

    logits = p[:, 5:]
    m = jnp.max(logits, axis=-1, keepdims=True)
    lse = m + jnp.log(jnp.sum(jnp.exp(logits - m), axis=-1, keepdims=True))
    ce = -jnp.sum(t[:, 5:] * (logits - lse), axis=-1)
    class_loss = jnp.where(
        n_obj > 0,
        jnp.sum(jnp.where(obj, ce, 0.0)) / jnp.maximum(n_obj, 1.0), 0.0)

    return (LAMBDA_COORD * coord_loss + LAMBDA_NOOBJ * noobj_loss
            + LAMBDA_OBJ * obj_loss + LAMBDA_CLASS * class_loss)


if __name__ == "__main__":
    def make_inputs(key, B, A, S, num_classes):
        C = 5 + num_classes
        k1, k2, k3, k4 = jax.random.split(key, 4)
        predictions = jax.random.normal(k1, (B, A, S, S, C), dtype=jnp.float32)
        conf = (jax.random.uniform(k2, (B, A, S, S)) < 0.3).astype(jnp.float32)
        xywh = jax.random.uniform(k3, (B, A, S, S, 4), minval=0.0, maxval=1.5)
        cls_idx = jax.random.randint(k4, (B, A, S, S), 0, num_classes)
        cls_onehot = jax.nn.one_hot(cls_idx, num_classes, dtype=jnp.float32)
        targets = jnp.concatenate([xywh, conf[..., None], cls_onehot], axis=-1)
        return predictions, targets

    key = jax.random.PRNGKey(0)
    k_a, k_b, k_c = jax.random.split(key, 3)

    def check(loss, ref):
        assert jnp.isfinite(loss), f"non-finite loss: {loss}"
        assert jnp.allclose(loss, ref, rtol=1e-4, atol=1e-4), (loss, ref)

    # Case 1: tiny, single block per split (N = 2*2*4*4 = 64 cells, C = 8).
    p1, t1 = make_inputs(k_a, 2, 2, 4, 3)
    loss1 = jax.block_until_ready(yolo_v2_loss(p1, t1))
    check(loss1, jax.block_until_ready(_reference_loss(p1, t1)))

    # Case 2: ragged cell count not divisible by 8 (N = 2*3*5*5 = 150).
    p2, t2 = make_inputs(k_b, 2, 3, 5, 3)
    loss2 = jax.block_until_ready(yolo_v2_loss(p2, t2))
    check(loss2, jax.block_until_ready(_reference_loss(p2, t2)))

    # Case 3: multi-block accumulation path (N = 4*5*13*13 = 3380, C = 10),
    # block width forced small so each split runs >1 grid step.
    p3, t3 = make_inputs(k_c, 4, 5, 13, 5)
    loss3 = jax.block_until_ready(yolo_v2_loss(p3, t3, max_block_cols=128))
    check(loss3, jax.block_until_ready(_reference_loss(p3, t3)))

    # Case 4: no object cells at all -> only the noobj term survives
    # (exercises the count-guarded divisions / torch's `if obj_mask.any()`).
    t4 = t1.at[..., 4].set(0.0)
    loss4 = jax.block_until_ready(yolo_v2_loss(p1, t4))
    check(loss4, jax.block_until_ready(_reference_loss(p1, t4)))

    print("KERNEL_OK")
</pallas_src>

<mosaic_0001>
module attributes {stable_mosaic.version = 11 : i64} {
  func.func @_yolo_loss_kernel(%arg0: i32, %arg1: i32, %arg2: memref<8x8x128xf32, #tpu.memory_space<vmem>>, %arg3: memref<8x8x128xf32, #tpu.memory_space<vmem>>, %arg4: memref<1x1x128xf32, #tpu.memory_space<vmem>>, %arg5: memref<6x8x128xf32, #tpu.memory_space<vmem>>) attributes {dimension_semantics = [#tpu.dimension_semantics<parallel>, #tpu.dimension_semantics<arbitrary>], iteration_bounds = array<i64: 2, 1>, scalar_prefetch = 0 : i64, scratch_operands = 1 : i64, tpu.core_type = #tpu.core_type<tc>, window_params = [{transform_indices = @transform_0, window_bounds = array<i64: 8, 8, 128>}, {transform_indices = @transform_1, window_bounds = array<i64: 8, 8, 128>}, {transform_indices = @transform_2, window_bounds = array<i64: 1, 1, 128>}]} {
    %c0_i32 = arith.constant 0 : i32
    %0 = arith.cmpi eq, %arg1, %c0_i32 : i32
    %1 = arith.extui %0 : i1 to i32
    %c0_i32_0 = arith.constant 0 : i32
    %2 = arith.cmpi ne, %1, %c0_i32_0 : i32
    scf.if %2 {
      %cst_73 = arith.constant 0.000000e+00 : f32
      %145 = vector.broadcast %cst_73 : f32 to vector<6x8x128xf32>
      %c0_74 = arith.constant 0 : index
      %c0_75 = arith.constant 0 : index
      %c0_76 = arith.constant 0 : index
      %146 = vector.load %arg5[%c0_74, %c0_75, %c0_76] : memref<6x8x128xf32, #tpu.memory_space<vmem>>, vector<6x8x128xf32>
      tpu.vector_store %arg5[%c0_74, %c0_75, %c0_76], %145 {strides = array<i32>} : memref<6x8x128xf32, #tpu.memory_space<vmem>>, vector<6x8x128xf32>,
    } else {
    }
    %3 = tpu.iota {dimensions = array<i32: 0>} : vector<8x128xi32>
    %4 = tpu.iota {dimensions = array<i32: 1>} : vector<8x128xi32>
    %c1_i32 = arith.constant 1 : i32
    %5 = arith.muli %arg0, %c1_i32 : i32
    %6 = arith.addi %5, %arg1 : i32
    %c128_i32 = arith.constant 128 : i32
    %7 = arith.muli %6, %c128_i32 : i32
    %c256_i32 = arith.constant 256 : i32
    %8 = vector.broadcast %c256_i32 : i32 to vector<8x128xi32>
    %9 = arith.muli %3, %8 : vector<8x128xi32>
    %10 = vector.broadcast %7 : i32 to vector<8x128xi32>
    %11 = arith.addi %9, %10 : vector<8x128xi32>
    %12 = arith.addi %11, %4 : vector<8x128xi32>
    %c64_i32 = arith.constant 64 : i32
    %13 = vector.broadcast %c64_i32 : i32 to vector<8x128xi32>
    %14 = arith.cmpi slt, %12, %13 : vector<8x128xi32>
    %c4 = arith.constant 4 : index
    %c0 = arith.constant 0 : index
    %c0_1 = arith.constant 0 : index
    %15 = vector.load %arg3[%c4, %c0, %c0_1] : memref<8x8x128xf32, #tpu.memory_space<vmem>>, vector<1x8x128xf32>
    %16 = vector.shape_cast %15 : vector<1x8x128xf32> to vector<8x128xf32>
    %c4_2 = arith.constant 4 : index
    %c0_3 = arith.constant 0 : index
    %c0_4 = arith.constant 0 : index
    %17 = vector.load %arg2[%c4_2, %c0_3, %c0_4] : memref<8x8x128xf32, #tpu.memory_space<vmem>>, vector<1x8x128xf32>
    %18 = vector.shape_cast %17 : vector<1x8x128xf32> to vector<8x128xf32>
    %cst = arith.constant -1.000000e+00 : f32
    %19 = vector.broadcast %cst : f32 to vector<8x128xf32>
    %20 = arith.select %14, %16, %19 : vector<8x128xi1>, vector<8x128xf32>
    %cst_5 = arith.constant 0.000000e+00 : f32
    %21 = vector.broadcast %cst_5 : f32 to vector<8x128xf32>
    %22 = arith.select %14, %18, %21 : vector<8x128xi1>, vector<8x128xf32>
    %cst_6 = arith.constant 1.000000e+00 : f32
    %23 = vector.broadcast %cst_6 : f32 to vector<8x128xf32>
    %24 = arith.cmpf oeq, %20, %23 : vector<8x128xf32>
    %25 = arith.extui %24 : vector<8x128xi1> to vector<8x128xi32>
    %26 = arith.sitofp %25 : vector<8x128xi32> to vector<8x128xf32>
    %cst_7 = arith.constant 0.000000e+00 : f32
    %27 = vector.broadcast %cst_7 : f32 to vector<8x128xf32>
    %28 = arith.cmpf oeq, %20, %27 : vector<8x128xf32>
    %29 = arith.extui %28 : vector<8x128xi1> to vector<8x128xi32>
    %30 = arith.sitofp %29 : vector<8x128xi32> to vector<8x128xf32>
    %cst_8 = arith.constant 0.000000e+00 : f32
    %31 = vector.broadcast %cst_8 : f32 to vector<8x128xf32>
    %32 = arith.maximumf %22, %31 : vector<8x128xf32>
    %33 = arith.mulf %22, %20 : vector<8x128xf32>
    %34 = arith.subf %32, %33 : vector<8x128xf32>
    %35 = math.absf %22 : vector<8x128xf32>
    %cst_9 = arith.constant 0.000000e+00 : f32
    %36 = vector.broadcast %cst_9 : f32 to vector<8x128xf32>
    %37 = arith.subf %36, %35 : vector<8x128xf32>
    %38 = math.exp %37 : vector<8x128xf32>
    %cst_10 = arith.constant 1.000000e+00 : f32
    %39 = vector.broadcast %cst_10 : f32 to vector<8x128xf32>
    %40 = arith.addf %39, %38 : vector<8x128xf32>
    %41 = math.log %40 : vector<8x128xf32>
    %42 = arith.addf %34, %41 : vector<8x128xf32>
    %c0_11 = arith.constant 0 : index
    %c0_12 = arith.constant 0 : index
    %c0_13 = arith.constant 0 : index
    %43 = vector.load %arg5[%c0_11, %c0_12, %c0_13] : memref<6x8x128xf32, #tpu.memory_space<vmem>>, vector<1x8x128xf32>
    %44 = vector.shape_cast %43 : vector<1x8x128xf32> to vector<8x128xf32>
    %45 = arith.mulf %30, %42 : vector<8x128xf32>
    %46 = arith.addf %44, %45 : vector<8x128xf32>
    %c0_14 = arith.constant 0 : index
    %c0_15 = arith.constant 0 : index
    %c0_16 = arith.constant 0 : index
    %47 = vector.load %arg5[%c0_14, %c0_15, %c0_16] : memref<6x8x128xf32, #tpu.memory_space<vmem>>, vector<1x8x128xf32>
    %48 = vector.shape_cast %47 : vector<1x8x128xf32> to vector<8x128xf32>
    %49 = vector.shape_cast %46 : vector<8x128xf32> to vector<1x8x128xf32>
    tpu.vector_store %arg5[%c0_14, %c0_15, %c0_16], %49 {strides = array<i32>} : memref<6x8x128xf32, #tpu.memory_space<vmem>>, vector<1x8x128xf32>,
    %c1 = arith.constant 1 : index
    %c0_17 = arith.constant 0 : index
    %c0_18 = arith.constant 0 : index
    %50 = vector.load %arg5[%c1, %c0_17, %c0_18] : memref<6x8x128xf32, #tpu.memory_space<vmem>>, vector<1x8x128xf32>
    %51 = vector.shape_cast %50 : vector<1x8x128xf32> to vector<8x128xf32>
    %52 = arith.mulf %26, %42 : vector<8x128xf32>
    %53 = arith.addf %51, %52 : vector<8x128xf32>
    %c1_19 = arith.constant 1 : index
    %c0_20 = arith.constant 0 : index
    %c0_21 = arith.constant 0 : index
    %54 = vector.load %arg5[%c1_19, %c0_20, %c0_21] : memref<6x8x128xf32, #tpu.memory_space<vmem>>, vector<1x8x128xf32>
    %55 = vector.shape_cast %54 : vector<1x8x128xf32> to vector<8x128xf32>
    %56 = vector.shape_cast %53 : vector<8x128xf32> to vector<1x8x128xf32>
    tpu.vector_store %arg5[%c1_19, %c0_20, %c0_21], %56 {strides = array<i32>} : memref<6x8x128xf32, #tpu.memory_space<vmem>>, vector<1x8x128xf32>,
    %c2 = arith.constant 2 : index
    %c0_22 = arith.constant 0 : index
    %c0_23 = arith.constant 0 : index
    %57 = vector.load %arg5[%c2, %c0_22, %c0_23] : memref<6x8x128xf32, #tpu.memory_space<vmem>>, vector<1x8x128xf32>
    %58 = vector.shape_cast %57 : vector<1x8x128xf32> to vector<8x128xf32>
    %59 = arith.addf %58, %30 : vector<8x128xf32>
    %c2_24 = arith.constant 2 : index
    %c0_25 = arith.constant 0 : index
    %c0_26 = arith.constant 0 : index
    %60 = vector.load %arg5[%c2_24, %c0_25, %c0_26] : memref<6x8x128xf32, #tpu.memory_space<vmem>>, vector<1x8x128xf32>
    %61 = vector.shape_cast %60 : vector<1x8x128xf32> to vector<8x128xf32>
    %62 = vector.shape_cast %59 : vector<8x128xf32> to vector<1x8x128xf32>
    tpu.vector_store %arg5[%c2_24, %c0_25, %c0_26], %62 {strides = array<i32>} : memref<6x8x128xf32, #tpu.memory_space<vmem>>, vector<1x8x128xf32>,
    %c3 = arith.constant 3 : index
    %c0_27 = arith.constant 0 : index
    %c0_28 = arith.constant 0 : index
    %63 = vector.load %arg5[%c3, %c0_27, %c0_28] : memref<6x8x128xf32, #tpu.memory_space<vmem>>, vector<1x8x128xf32>
    %64 = vector.shape_cast %63 : vector<1x8x128xf32> to vector<8x128xf32>
    %65 = arith.addf %64, %26 : vector<8x128xf32>
    %c3_29 = arith.constant 3 : index
    %c0_30 = arith.constant 0 : index
    %c0_31 = arith.constant 0 : index
    %66 = vector.load %arg5[%c3_29, %c0_30, %c0_31] : memref<6x8x128xf32, #tpu.memory_space<vmem>>, vector<1x8x128xf32>
    %67 = vector.shape_cast %66 : vector<1x8x128xf32> to vector<8x128xf32>
    %68 = vector.shape_cast %65 : vector<8x128xf32> to vector<1x8x128xf32>
    tpu.vector_store %arg5[%c3_29, %c0_30, %c0_31], %68 {strides = array<i32>} : memref<6x8x128xf32, #tpu.memory_space<vmem>>, vector<1x8x128xf32>,
    %c0_32 = arith.constant 0 : index
    %c0_33 = arith.constant 0 : index
    %c0_34 = arith.constant 0 : index
    %69 = vector.load %arg2[%c0_32, %c0_33, %c0_34] : memref<8x8x128xf32, #tpu.memory_space<vmem>>, vector<2x8x128xf32>
    %cst_35 = arith.constant 0.000000e+00 : f32
    %70 = vector.shape_cast %24 : vector<8x128xi1> to vector<1x8x128xi1>
    %71 = vector.broadcast %70 : vector<1x8x128xi1> to vector<2x8x128xi1>
    %72 = vector.broadcast %cst_35 : f32 to vector<2x8x128xf32>
    %73 = arith.select %71, %69, %72 : vector<2x8x128xi1>, vector<2x8x128xf32>
    %c2_36 = arith.constant 2 : index
    %c0_37 = arith.constant 0 : index
    %c0_38 = arith.constant 0 : index
    %74 = vector.load %arg2[%c2_36, %c0_37, %c0_38] : memref<8x8x128xf32, #tpu.memory_space<vmem>>, vector<2x8x128xf32>
    %cst_39 = arith.constant 0.000000e+00 : f32
    %75 = vector.shape_cast %24 : vector<8x128xi1> to vector<1x8x128xi1>
    %76 = vector.broadcast %75 : vector<1x8x128xi1> to vector<2x8x128xi1>
    %77 = vector.broadcast %cst_39 : f32 to vector<2x8x128xf32>
    %78 = arith.select %76, %74, %77 : vector<2x8x128xi1>, vector<2x8x128xf32>
    %c0_40 = arith.constant 0 : index
    %c0_41 = arith.constant 0 : index
    %c0_42 = arith.constant 0 : index
    %79 = vector.load %arg3[%c0_40, %c0_41, %c0_42] : memref<8x8x128xf32, #tpu.memory_space<vmem>>, vector<2x8x128xf32>
    %cst_43 = arith.constant 0.000000e+00 : f32
    %80 = vector.shape_cast %24 : vector<8x128xi1> to vector<1x8x128xi1>
    %81 = vector.broadcast %80 : vector<1x8x128xi1> to vector<2x8x128xi1>
    %82 = vector.broadcast %cst_43 : f32 to vector<2x8x128xf32>
    %83 = arith.select %81, %79, %82 : vector<2x8x128xi1>, vector<2x8x128xf32>
    %c2_44 = arith.constant 2 : index
    %c0_45 = arith.constant 0 : index
    %c0_46 = arith.constant 0 : index
    %84 = vector.load %arg3[%c2_44, %c0_45, %c0_46] : memref<8x8x128xf32, #tpu.memory_space<vmem>>, vector<2x8x128xf32>
    %cst_47 = arith.constant 0.000000e+00 : f32
    %85 = vector.shape_cast %24 : vector<8x128xi1> to vector<1x8x128xi1>
    %86 = vector.broadcast %85 : vector<1x8x128xi1> to vector<2x8x128xi1>
    %87 = vector.broadcast %cst_47 : f32 to vector<2x8x128xf32>
    %88 = arith.select %86, %84, %87 : vector<2x8x128xi1>, vector<2x8x128xf32>
    %89 = arith.negf %73 : vector<2x8x128xf32>
    %90 = math.exp %89 : vector<2x8x128xf32>
    %cst_48 = arith.constant 1.000000e+00 : f32
    %91 = vector.broadcast %cst_48 : f32 to vector<2x8x128xf32>
    %92 = arith.addf %91, %90 : vector<2x8x128xf32>
    %93 = arith.divf %91, %92 : vector<2x8x128xf32>
    %94 = arith.subf %93, %83 : vector<2x8x128xf32>
    %95 = arith.mulf %94, %94 : vector<2x8x128xf32>
    %96 = math.exp %78 : vector<2x8x128xf32>
    %97 = arith.subf %96, %88 : vector<2x8x128xf32>
    %98 = arith.mulf %97, %97 : vector<2x8x128xf32>
    %99 = arith.addf %95, %98 : vector<2x8x128xf32>
    %c4_49 = arith.constant 4 : index
    %c0_50 = arith.constant 0 : index
    %c0_51 = arith.constant 0 : index
    %100 = vector.load %arg5[%c4_49, %c0_50, %c0_51] : memref<6x8x128xf32, #tpu.memory_space<vmem>>, vector<1x8x128xf32>
    %101 = vector.shape_cast %100 : vector<1x8x128xf32> to vector<8x128xf32>
    %102 = vector.extract_strided_slice %99 {offsets = [0, 0, 0], sizes = [1, 8, 128], strides = [1, 1, 1]} : vector<2x8x128xf32> to vector<1x8x128xf32>
    %103 = vector.shape_cast %102 : vector<1x8x128xf32> to vector<8x128xf32>
    %104 = vector.extract_strided_slice %99 {offsets = [1, 0, 0], sizes = [1, 8, 128], strides = [1, 1, 1]} : vector<2x8x128xf32> to vector<1x8x128xf32>
    %105 = vector.shape_cast %104 : vector<1x8x128xf32> to vector<8x128xf32>
    %106 = arith.addf %103, %105 : vector<8x128xf32>
    %107 = arith.mulf %26, %106 : vector<8x128xf32>
    %108 = arith.addf %101, %107 : vector<8x128xf32>
    %c4_52 = arith.constant 4 : index
    %c0_53 = arith.constant 0 : index
    %c0_54 = arith.constant 0 : index
    %109 = vector.load %arg5[%c4_52, %c0_53, %c0_54] : memref<6x8x128xf32, #tpu.memory_space<vmem>>, vector<1x8x128xf32>
    %110 = vector.shape_cast %109 : vector<1x8x128xf32> to vector<8x128xf32>
    %111 = vector.shape_cast %108 : vector<8x128xf32> to vector<1x8x128xf32>
    tpu.vector_store %arg5[%c4_52, %c0_53, %c0_54], %111 {strides = array<i32>} : memref<6x8x128xf32, #tpu.memory_space<vmem>>, vector<1x8x128xf32>,
    %c5 = arith.constant 5 : index
    %c0_55 = arith.constant 0 : index
    %c0_56 = arith.constant 0 : index
    %112 = vector.load %arg2[%c5, %c0_55, %c0_56] : memref<8x8x128xf32, #tpu.memory_space<vmem>>, vector<3x8x128xf32>
    %cst_57 = arith.constant 0.000000e+00 : f32
    %113 = vector.shape_cast %24 : vector<8x128xi1> to vector<1x8x128xi1>
    %114 = vector.broadcast %113 : vector<1x8x128xi1> to vector<3x8x128xi1>
    %115 = vector.broadcast %cst_57 : f32 to vector<3x8x128xf32>
    %116 = arith.select %114, %112, %115 : vector<3x8x128xi1>, vector<3x8x128xf32>
    %c5_58 = arith.constant 5 : index
    %c0_59 = arith.constant 0 : index
    %c0_60 = arith.constant 0 : index
    %117 = vector.load %arg3[%c5_58, %c0_59, %c0_60] : memref<8x8x128xf32, #tpu.memory_space<vmem>>, vector<3x8x128xf32>
    %cst_61 = arith.constant 0.000000e+00 : f32
    %118 = vector.shape_cast %24 : vector<8x128xi1> to vector<1x8x128xi1>
    %119 = vector.broadcast %118 : vector<1x8x128xi1> to vector<3x8x128xi1>
    %120 = vector.broadcast %cst_61 : f32 to vector<3x8x128xf32>
    %121 = arith.select %119, %117, %120 : vector<3x8x128xi1>, vector<3x8x128xf32>
    %cst_62 = arith.constant dense<0xFF800000> : vector<8x128xf32>
    %122 = vector.multi_reduction <maximumf>, %116, %cst_62 [0] : vector<3x8x128xf32> to vector<8x128xf32>
    %123 = vector.shape_cast %122 : vector<8x128xf32> to vector<1x8x128xf32>
    %124 = vector.broadcast %123 : vector<1x8x128xf32> to vector<3x8x128xf32>
    %125 = arith.subf %116, %124 : vector<3x8x128xf32>
    %126 = math.exp %125 : vector<3x8x128xf32>
    %cst_63 = arith.constant dense<0.000000e+00> : vector<8x128xf32>
    %127 = vector.multi_reduction <add>, %126, %cst_63 [0] : vector<3x8x128xf32> to vector<8x128xf32>
    %128 = math.log %127 : vector<8x128xf32>
    %129 = arith.addf %122, %128 : vector<8x128xf32>
    %c5_64 = arith.constant 5 : index
    %c0_65 = arith.constant 0 : index
    %c0_66 = arith.constant 0 : index
    %130 = vector.load %arg5[%c5_64, %c0_65, %c0_66] : memref<6x8x128xf32, #tpu.memory_space<vmem>>, vector<1x8x128xf32>
    %131 = vector.shape_cast %130 : vector<1x8x128xf32> to vector<8x128xf32>
    %132 = vector.shape_cast %129 : vector<8x128xf32> to vector<1x8x128xf32>
    %133 = vector.broadcast %132 : vector<1x8x128xf32> to vector<3x8x128xf32>
    %134 = arith.subf %133, %116 : vector<3x8x128xf32>
    %135 = arith.mulf %121, %134 : vector<3x8x128xf32>
    %cst_67 = arith.constant dense<0.000000e+00> : vector<8x128xf32>
    %136 = vector.multi_reduction <add>, %135, %cst_67 [0] : vector<3x8x128xf32> to vector<8x128xf32>
    %137 = arith.mulf %26, %136 : vector<8x128xf32>
    %138 = arith.addf %131, %137 : vector<8x128xf32>
    %c5_68 = arith.constant 5 : index
    %c0_69 = arith.constant 0 : index
    %c0_70 = arith.constant 0 : index
    %139 = vector.load %arg5[%c5_68, %c0_69, %c0_70] : memref<6x8x128xf32, #tpu.memory_space<vmem>>, vector<1x8x128xf32>
    %140 = vector.shape_cast %139 : vector<1x8x128xf32> to vector<8x128xf32>
    %141 = vector.shape_cast %138 : vector<8x128xf32> to vector<1x8x128xf32>
    tpu.vector_store %arg5[%c5_68, %c0_69, %c0_70], %141 {strides = array<i32>} : memref<6x8x128xf32, #tpu.memory_space<vmem>>, vector<1x8x128xf32>,
    %c0_i32_71 = arith.constant 0 : i32
    %142 = arith.cmpi eq, %arg1, %c0_i32_71 : i32
    %143 = arith.extui %142 : i1 to i32
    %c0_i32_72 = arith.constant 0 : i32
    %144 = arith.cmpi ne, %143, %c0_i32_72 : i32
    scf.if %144 {
      %145 = tpu.iota {dimensions = array<i32: 2>} : vector<1x1x128xi32>
      %cst_73 = arith.constant 0.000000e+00 : f32
      %146 = vector.broadcast %cst_73 : f32 to vector<1x1x128xf32>
      %c0_74 = arith.constant 0 : index
      %c0_75 = arith.constant 0 : index
      %c0_76 = arith.constant 0 : index
      %147 = vector.load %arg5[%c0_74, %c0_75, %c0_76] : memref<6x8x128xf32, #tpu.memory_space<vmem>>, vector<1x8x128xf32>
      %148 = vector.shape_cast %147 : vector<1x8x128xf32> to vector<8x128xf32>
      %149 = vector.shape_cast %148 : vector<8x128xf32> to vector<1x8x128xf32>
      %cst_77 = arith.constant dense<0.000000e+00> : vector<1xf32>
      %150 = vector.multi_reduction <add>, %149, %cst_77 [1, 2] : vector<1x8x128xf32> to vector<1xf32>
      %151 = vector.shape_cast %150 : vector<1xf32> to vector<1x1x1xf32>
      %152 = vector.extract %151[0, 0, 0] : f32 from vector<1x1x1xf32>
      %153 = vector.broadcast %152 : f32 to vector<1x1xf32>
      %c0_i32_78 = arith.constant 0 : i32
      %154 = vector.broadcast %c0_i32_78 : i32 to vector<1x1x128xi32>
      %155 = arith.cmpi eq, %145, %154 : vector<1x1x128xi32>
      %cst_79 = arith.constant 0.000000e+00 : f32
      %156 = vector.shape_cast %153 : vector<1x1xf32> to vector<1x1x1xf32>
      %157 = vector.broadcast %156 : vector<1x1x1xf32> to vector<1x1x128xf32>
      %158 = vector.broadcast %cst_79 : f32 to vector<1x1x128xf32>
      %159 = arith.select %155, %157, %158 : vector<1x1x128xi1>, vector<1x1x128xf32>
      %160 = arith.addf %146, %159 : vector<1x1x128xf32>
      %c1_80 = arith.constant 1 : index
      %c0_81 = arith.constant 0 : index
      %c0_82 = arith.constant 0 : index
      %161 = vector.load %arg5[%c1_80, %c0_81, %c0_82] : memref<6x8x128xf32, #tpu.memory_space<vmem>>, vector<1x8x128xf32>
      %162 = vector.shape_cast %161 : vector<1x8x128xf32> to vector<8x128xf32>
      %163 = vector.shape_cast %162 : vector<8x128xf32> to vector<1x8x128xf32>
      %cst_83 = arith.constant dense<0.000000e+00> : vector<1xf32>
      %164 = vector.multi_reduction <add>, %163, %cst_83 [1, 2] : vector<1x8x128xf32> to vector<1xf32>
      %165 = vector.shape_cast %164 : vector<1xf32> to vector<1x1x1xf32>
      %166 = vector.extract %165[0, 0, 0] : f32 from vector<1x1x1xf32>
      %167 = vector.broadcast %166 : f32 to vector<1x1xf32>
      %c1_i32_84 = arith.constant 1 : i32
      %168 = vector.broadcast %c1_i32_84 : i32 to vector<1x1x128xi32>
      %169 = arith.cmpi eq, %145, %168 : vector<1x1x128xi32>
      %cst_85 = arith.constant 0.000000e+00 : f32
      %170 = vector.shape_cast %167 : vector<1x1xf32> to vector<1x1x1xf32>
      %171 = vector.broadcast %170 : vector<1x1x1xf32> to vector<1x1x128xf32>
      %172 = vector.broadcast %cst_85 : f32 to vector<1x1x128xf32>
      %173 = arith.select %169, %171, %172 : vector<1x1x128xi1>, vector<1x1x128xf32>
      %174 = arith.addf %160, %173 : vector<1x1x128xf32>
      %c2_86 = arith.constant 2 : index
      %c0_87 = arith.constant 0 : index
      %c0_88 = arith.constant 0 : index
      %175 = vector.load %arg5[%c2_86, %c0_87, %c0_88] : memref<6x8x128xf32, #tpu.memory_space<vmem>>, vector<1x8x128xf32>
      %176 = vector.shape_cast %175 : vector<1x8x128xf32> to vector<8x128xf32>
      %177 = vector.shape_cast %176 : vector<8x128xf32> to vector<1x8x128xf32>
      %cst_89 = arith.constant dense<0.000000e+00> : vector<1xf32>
      %178 = vector.multi_reduction <add>, %177, %cst_89 [1, 2] : vector<1x8x128xf32> to vector<1xf32>
      %179 = vector.shape_cast %178 : vector<1xf32> to vector<1x1x1xf32>
      %180 = vector.extract %179[0, 0, 0] : f32 from vector<1x1x1xf32>
      %181 = vector.broadcast %180 : f32 to vector<1x1xf32>
      %c2_i32 = arith.constant 2 : i32
      %182 = vector.broadcast %c2_i32 : i32 to vector<1x1x128xi32>
      %183 = arith.cmpi eq, %145, %182 : vector<1x1x128xi32>
      %cst_90 = arith.constant 0.000000e+00 : f32
      %184 = vector.shape_cast %181 : vector<1x1xf32> to vector<1x1x1xf32>
      %185 = vector.broadcast %184 : vector<1x1x1xf32> to vector<1x1x128xf32>
      %186 = vector.broadcast %cst_90 : f32 to vector<1x1x128xf32>
      %187 = arith.select %183, %185, %186 : vector<1x1x128xi1>, vector<1x1x128xf32>
      %188 = arith.addf %174, %187 : vector<1x1x128xf32>
      %c3_91 = arith.constant 3 : index
      %c0_92 = arith.constant 0 : index
      %c0_93 = arith.constant 0 : index
      %189 = vector.load %arg5[%c3_91, %c0_92, %c0_93] : memref<6x8x128xf32, #tpu.memory_space<vmem>>, vector<1x8x128xf32>
      %190 = vector.shape_cast %189 : vector<1x8x128xf32> to vector<8x128xf32>
      %191 = vector.shape_cast %190 : vector<8x128xf32> to vector<1x8x128xf32>
      %cst_94 = arith.constant dense<0.000000e+00> : vector<1xf32>
      %192 = vector.multi_reduction <add>, %191, %cst_94 [1, 2] : vector<1x8x128xf32> to vector<1xf32>
      %193 = vector.shape_cast %192 : vector<1xf32> to vector<1x1x1xf32>
      %194 = vector.extract %193[0, 0, 0] : f32 from vector<1x1x1xf32>
      %195 = vector.broadcast %194 : f32 to vector<1x1xf32>
      %c3_i32 = arith.constant 3 : i32
      %196 = vector.broadcast %c3_i32 : i32 to vector<1x1x128xi32>
      %197 = arith.cmpi eq, %145, %196 : vector<1x1x128xi32>
      %cst_95 = arith.constant 0.000000e+00 : f32
      %198 = vector.shape_cast %195 : vector<1x1xf32> to vector<1x1x1xf32>
      %199 = vector.broadcast %198 : vector<1x1x1xf32> to vector<1x1x128xf32>
      %200 = vector.broadcast %cst_95 : f32 to vector<1x1x128xf32>
      %201 = arith.select %197, %199, %200 : vector<1x1x128xi1>, vector<1x1x128xf32>
      %202 = arith.addf %188, %201 : vector<1x1x128xf32>
      %c4_96 = arith.constant 4 : index
      %c0_97 = arith.constant 0 : index
      %c0_98 = arith.constant 0 : index
      %203 = vector.load %arg5[%c4_96, %c0_97, %c0_98] : memref<6x8x128xf32, #tpu.memory_space<vmem>>, vector<1x8x128xf32>
      %204 = vector.shape_cast %203 : vector<1x8x128xf32> to vector<8x128xf32>
      %205 = vector.shape_cast %204 : vector<8x128xf32> to vector<1x8x128xf32>
      %cst_99 = arith.constant dense<0.000000e+00> : vector<1xf32>
      %206 = vector.multi_reduction <add>, %205, %cst_99 [1, 2] : vector<1x8x128xf32> to vector<1xf32>
      %207 = vector.shape_cast %206 : vector<1xf32> to vector<1x1x1xf32>
      %208 = vector.extract %207[0, 0, 0] : f32 from vector<1x1x1xf32>
      %209 = vector.broadcast %208 : f32 to vector<1x1xf32>
      %c4_i32 = arith.constant 4 : i32
      %210 = vector.broadcast %c4_i32 : i32 to vector<1x1x128xi32>
      %211 = arith.cmpi eq, %145, %210 : vector<1x1x128xi32>
      %cst_100 = arith.constant 0.000000e+00 : f32
      %212 = vector.shape_cast %209 : vector<1x1xf32> to vector<1x1x1xf32>
      %213 = vector.broadcast %212 : vector<1x1x1xf32> to vector<1x1x128xf32>
      %214 = vector.broadcast %cst_100 : f32 to vector<1x1x128xf32>
      %215 = arith.select %211, %213, %214 : vector<1x1x128xi1>, vector<1x1x128xf32>
      %216 = arith.addf %202, %215 : vector<1x1x128xf32>
      %c5_101 = arith.constant 5 : index
      %c0_102 = arith.constant 0 : index
      %c0_103 = arith.constant 0 : index
      %217 = vector.load %arg5[%c5_101, %c0_102, %c0_103] : memref<6x8x128xf32, #tpu.memory_space<vmem>>, vector<1x8x128xf32>
      %218 = vector.shape_cast %217 : vector<1x8x128xf32> to vector<8x128xf32>
      %219 = vector.shape_cast %218 : vector<8x128xf32> to vector<1x8x128xf32>
      %cst_104 = arith.constant dense<0.000000e+00> : vector<1xf32>
      %220 = vector.multi_reduction <add>, %219, %cst_104 [1, 2] : vector<1x8x128xf32> to vector<1xf32>
      %221 = vector.shape_cast %220 : vector<1xf32> to vector<1x1x1xf32>
      %222 = vector.extract %221[0, 0, 0] : f32 from vector<1x1x1xf32>
      %223 = vector.broadcast %222 : f32 to vector<1x1xf32>
      %c5_i32 = arith.constant 5 : i32
      %224 = vector.broadcast %c5_i32 : i32 to vector<1x1x128xi32>
      %225 = arith.cmpi eq, %145, %224 : vector<1x1x128xi32>
      %cst_105 = arith.constant 0.000000e+00 : f32
      %226 = vector.shape_cast %223 : vector<1x1xf32> to vector<1x1x1xf32>
      %227 = vector.broadcast %226 : vector<1x1x1xf32> to vector<1x1x128xf32>
      %228 = vector.broadcast %cst_105 : f32 to vector<1x1x128xf32>
      %229 = arith.select %225, %227, %228 : vector<1x1x128xi1>, vector<1x1x128xf32>
      %230 = arith.addf %216, %229 : vector<1x1x128xf32>
      %c0_106 = arith.constant 0 : index
      %c0_107 = arith.constant 0 : index
      %c0_108 = arith.constant 0 : index
      %231 = vector.load %arg4[%c0_106, %c0_107, %c0_108] : memref<1x1x128xf32, #tpu.memory_space<vmem>>, vector<1x1x128xf32>
      tpu.vector_store %arg4[%c0_106, %c0_107, %c0_108], %230 {strides = array<i32>} : memref<1x1x128xf32, #tpu.memory_space<vmem>>, vector<1x1x128xf32>,
    } else {
    }
    return
  }
  func.func @transform_0(%arg0: i32, %arg1: i32) -> (i32, i32, i32) {
    %c1_i32 = arith.constant 1 : i32
    %0 = arith.muli %arg0, %c1_i32 : i32
    %1 = arith.addi %0, %arg1 : i32
    %c0_i32 = arith.constant 0 : i32
    %c0_i32_0 = arith.constant 0 : i32
    %c0_i32_1 = arith.constant 0 : i32
    return %c0_i32, %c0_i32_0, %1 : i32, i32, i32
  }
  func.func @transform_1(%arg0: i32, %arg1: i32) -> (i32, i32, i32) {
    %c1_i32 = arith.constant 1 : i32
    %0 = arith.muli %arg0, %c1_i32 : i32
    %1 = arith.addi %0, %arg1 : i32
    %c0_i32 = arith.constant 0 : i32
    %c0_i32_0 = arith.constant 0 : i32
    %c0_i32_1 = arith.constant 0 : i32
    return %c0_i32, %c0_i32_0, %1 : i32, i32, i32
  }
  func.func @transform_2(%arg0: i32, %arg1: i32) -> (i32, i32, i32) {
    %c0_i32 = arith.constant 0 : i32
    %c0_i32_0 = arith.constant 0 : i32
    %c0_i32_1 = arith.constant 0 : i32
    return %arg0, %c0_i32, %c0_i32_0 : i32, i32, i32
  }
}

</mosaic_0001>

<llo_original>
// kernel: tpu_custom_call.1
$region0: #{tpu_custom_call.1}
  #allocation0 [shape = 'u32[]', space=smem, size = 0x4, offset = 0x4, fixed_abs, tag = 'smem constant byte address 0x4 - core index']
  #allocation1 [shape = 'u32[144,128]{1,0:T(1,128)}', space=vmem, size = 0x12000, scoped, tag = 'internal scratch']
  #allocation2 [shape = 'f32[6,8,128]{2,1,0:T(8,128)}', space=vmem, size = 0x6000, scoped, tag = 'scratch operand']
  %s0 = inlined_call_operand.hbm [shape: f32[8,8,256], index: 0, kind: input, shape index: {}]
  %s1 = inlined_call_operand.hbm [shape: f32[8,8,256], index: 1, kind: input, shape index: {}]
  %s2 = inlined_call_operand.hbm [shape: f32[2,1,128], index: 2, kind: output, shape index: {}]
  %s3 = sld [smem:[#allocation0]]
  $region57: #{tpu_custom_call.1} parent=0
    _
  %s5 = ssub.s32 1, %s3
  %s6 = scalar_select 0, %s5, %s3
  $region1: #{tpu_custom_call.1} parent=0
    #allocation3 [shape = 'u8[65536]{0}', space=vmem, size = 0x10000, scoped, tag = 'input window, operand 0']
    #allocation4 [shape = 's32[2]{0}', space=sflag, size = 0x8, scoped, tag = 'scoped memory for tpu_custom_call.1']
    #allocation5 [shape = 's32[2]{0}', space=sflag, size = 0x8, scoped, tag = 'scoped memory for tpu_custom_call.1']
    #allocation6 [shape = 'u8[65536]{0}', space=vmem, size = 0x10000, scoped, tag = 'input window, operand 1']
    #allocation7 [shape = 's32[2]{0}', space=sflag, size = 0x8, scoped, tag = 'scoped memory for tpu_custom_call.1']
    #allocation8 [shape = 'u8[1024]{0}', space=vmem, size = 0x400, scoped, tag = 'output window, operand 0']
    %7 = vsyncpa [#allocation4], 0
    %s8 = scalar_lea.sflag [#allocation4], 1
    %9 = vsyncpa %s8, 0
    %10 = vsyncpa [#allocation7], 0
    %s11 = scalar_lea.sflag [#allocation7], 1
    %12 = vsyncpa %s11, 0
    %13 = vsyncpa [#allocation5], 0
    %s14 = scalar_lea.sflag [#allocation5], 1
    %15 = vsyncpa %s14, 0
    loop: start=0, step=1, limit=4
    $region2: #{tpu_custom_call.1} parent=1 // loop_pre_header
      _
    $region3: #{tpu_custom_call.1} parent=1 // loop_header
      %s17 = sphi 0, %s21
      %p18 = scmp.ge.s32.totalorder %s17, 4
      %s24 = sphi 0, %s36
      %s25 = sphi 0, %s32
      %s26 = sphi 0, %s24
      %s27 = sphi 0, %s25
      %s28 = sphi 0, %s26
      %s29 = sphi 0, %s27
      %s41 = sphi 0, %s43
      %s44 = sphi 0, %s41
      %s45 = sphi 0, %s44
      %s61 = sphi 0, %s45
      %s69 = sphi 0, %s71
      %s72 = sphi 0, %s69
      %s73 = sphi 0, %s72
      %s89 = sphi 0, %s73
      %s95 = sphi 0, %s97
      %s98 = sphi 0, %s95
      %s99 = sphi 0, %s98
      %s115 = sphi 0, %s99
    $region4: #{tpu_custom_call.1} parent=1 // loop_header_branch
      %20 = sbr.rel (%p18) target = $region8
    $region5: #{tpu_custom_call.1} parent=1 // loop_body
      %s22 = ssub.s32 %s17, 1
      %s23 = ssub.s32 %s17, 2
      %s30 = sadd.s32 1, %s25
      %p31 = scmp.ge.s32.totalorder %s30, 1
      %s32 = scalar_select %p31, 0, %s30
      %s33 = sadd.s32 1, %s24
      %s34 = scalar_select %p31, %s33, %s24
      %p35 = scmp.ge.s32.totalorder %s34, 2
      %s36 = scalar_select %p35, 0, %s34
      %s37 = sadd.s32 %s24, %s25
      %s38 = sadd.s32 %s36, %s32
      %s39 = ssub.s32 %s37, %s38
      %p40 = scmp.eq.s32.totalorder %s39, 0
      %s42 = sadd.s32 %s41, 1
      %s43 = scalar_select %p40, %s41, %s42
      %p46 = pneg %p40
      %p47 = scmp.eq.s32.totalorder %s17, 1
      %p48 = por %p46, %p47
      %p49 = scmp.ne.s32.totalorder %s41, %s44
      %p50 = scmp.eq.s32.totalorder %s17, 0
      %p51 = por %p49, %p50
      %p52 = scmp.ne.s32.totalorder %s41, %s44
      %p53 = scmp.eq.s32.totalorder %s22, 1
      %p54 = por %p52, %p53
      %p55 = scmp.ne.s32.totalorder %s44, %s45
      %p56 = scmp.eq.s32.totalorder %s22, 0
      %p57 = por %p55, %p56
      %p58 = scmp.ne.s32.totalorder %s44, %s45
      %p59 = scmp.eq.s32.totalorder %s23, 1
      %p60 = por %p58, %p59
      %p62 = scmp.ne.s32.totalorder %s45, %s61
      %p63 = scmp.eq.s32.totalorder %s23, 0
      %p64 = por %p62, %p63
      %s65 = sadd.s32 %s24, %s25
      %s66 = sadd.s32 %s36, %s32
      %s67 = ssub.s32 %s65, %s66
      %p68 = scmp.eq.s32.totalorder %s67, 0
      %s70 = sadd.s32 %s69, 1
      %s71 = scalar_select %p68, %s69, %s70
      %p74 = pneg %p68
      %p75 = scmp.eq.s32.totalorder %s17, 1
      %p76 = por %p74, %p75
      %p77 = scmp.ne.s32.totalorder %s69, %s72
      %p78 = scmp.eq.s32.totalorder %s17, 0
      %p79 = por %p77, %p78
      %p80 = scmp.ne.s32.totalorder %s69, %s72
      %p81 = scmp.eq.s32.totalorder %s22, 1
      %p82 = por %p80, %p81
      %p83 = scmp.ne.s32.totalorder %s72, %s73
      %p84 = scmp.eq.s32.totalorder %s22, 0
      %p85 = por %p83, %p84
      %p86 = scmp.ne.s32.totalorder %s72, %s73
      %p87 = scmp.eq.s32.totalorder %s23, 1
      %p88 = por %p86, %p87
      %p90 = scmp.ne.s32.totalorder %s73, %s89
      %p91 = scmp.eq.s32.totalorder %s23, 0
      %p92 = por %p90, %p91
      %s93 = ssub.s32 %s24, %s36
      %p94 = scmp.eq.s32.totalorder %s93, 0
      %s96 = sadd.s32 %s95, 1
      %s97 = scalar_select %p94, %s95, %s96
      %p100 = pneg %p94
      %p101 = scmp.eq.s32.totalorder %s17, 1
      %p102 = por %p100, %p101
      %p103 = scmp.ne.s32.totalorder %s95, %s98
      %p104 = scmp.eq.s32.totalorder %s17, 0
      %p105 = por %p103, %p104
      %p106 = scmp.ne.s32.totalorder %s95, %s98
      %p107 = scmp.eq.s32.totalorder %s22, 1
      %p108 = por %p106, %p107
      %p109 = scmp.ne.s32.totalorder %s98, %s99
      %p110 = scmp.eq.s32.totalorder %s22, 0
      %p111 = por %p109, %p110
      %p112 = scmp.ne.s32.totalorder %s98, %s99
      %p113 = scmp.eq.s32.totalorder %s23, 1
      %p114 = por %p112, %p113
      %p116 = scmp.ne.s32.totalorder %s99, %s115
      %p117 = scmp.eq.s32.totalorder %s23, 0
      %p118 = por %p116, %p117
      %p119 = scmp.le.s32.totalorder 1, %s17
      %p120 = scmp.lt.s32.totalorder %s17, 3
      %p121 = pnand %p119, %p120
      %p122 = pneg %p121
      // Predicated region
      $region9: #{tpu_custom_call.1} parent=5 // pred_check
        _
      $region10: #{tpu_custom_call.1} parent=5 // pred_check_branch
        %124 = sbr.rel (%p121) target = $region12
      $region11: #{tpu_custom_call.1} parent=5 // pred_region
        %s125 = ssub.s32 %s17, 1
      $region12: #{tpu_custom_call.1} parent=5 // pred_fallthru
        _
      %p126 = scmp.lt.s32.totalorder %s17, 2
      // Predicated region
      $region13: #{tpu_custom_call.1} parent=5 // pred_check
        %p127 = pneg %p126
      $region14: #{tpu_custom_call.1} parent=5 // pred_check_branch
        %129 = sbr.rel (%p127) target = $region16
      $region15: #{tpu_custom_call.1} parent=5 // pred_region
        // Predicated region
        $region17: #{tpu_custom_call.1} parent=15 // pred_check
          %p130 = pneg %p51
        $region18: #{tpu_custom_call.1} parent=15 // pred_check_branch
          %132 = sbr.rel (%p130) target = $region20
        $region19: #{tpu_custom_call.1} parent=15 // pred_region
          %s133 = sand.u32 %s41, 1
          %s134 = scalar_lea.sflag [#allocation4], %s133
          %s135 = sand.u32 %s41, 1
          %s136 = smul.addr %s135, 64
          %s137 = scalar_lea.vmem [#allocation3], %s136
          %s138 = sadd.s32 %s24, %s25
          %s140 = ssub.s32 1024, 1024
          %141 = vsyncadd %s134, %s140
          %s142 = smul.addr %s138, 128
          %s143 = scalar_lea.hbm %s0, %s142
          %s144 = sshll.u32 %s137, 4
          %s145 = int_to_ptr.vmem [resolvable:$true] %s144
          %150 = dma.hbm_to_vmem [thread:$0]  %s143, 1024, %s145, %s134, 256, 128, 8
        $region20: #{tpu_custom_call.1} parent=15 // pred_fallthru
          _
        // Predicated region
        $region21: #{tpu_custom_call.1} parent=15 // pred_check
          %p151 = pneg %p79
        $region22: #{tpu_custom_call.1} parent=15 // pred_check_branch
          %153 = sbr.rel (%p151) target = $region24
        $region23: #{tpu_custom_call.1} parent=15 // pred_region
          %s154 = sand.u32 %s69, 1
          %s155 = scalar_lea.sflag [#allocation7], %s154
          %s156 = sand.u32 %s69, 1
          %s157 = smul.addr %s156, 64
          %s158 = scalar_lea.vmem [#allocation6], %s157
          %s159 = sadd.s32 %s24, %s25
          %s161 = ssub.s32 1024, 1024
          %162 = vsyncadd %s155, %s161
          %s163 = smul.addr %s159, 128
          %s164 = scalar_lea.hbm %s1, %s163
          %s165 = sshll.u32 %s158, 4
          %s166 = int_to_ptr.vmem [resolvable:$true] %s165
          %171 = dma.hbm_to_vmem [thread:$0]  %s164, 1024, %s166, %s155, 256, 128, 8
        $region24: #{tpu_custom_call.1} parent=15 // pred_fallthru
          _
      $region16: #{tpu_custom_call.1} parent=5 // pred_fallthru
        _
      %p172 = scmp.le.s32.totalorder 1, %s17
      %p173 = scmp.lt.s32.totalorder %s17, 3
      %p174 = pnand %p172, %p173
      %p175 = pneg %p174
      // Predicated region
      $region25: #{tpu_custom_call.1} parent=5 // pred_check
        _
      $region26: #{tpu_custom_call.1} parent=5 // pred_check_branch
        %177 = sbr.rel (%p174) target = $region28
      $region27: #{tpu_custom_call.1} parent=5 // pred_region
        %s178 = ssub.s32 %s17, 1
        %s179 = sand.u32 %s44, 1
        %s180 = scalar_lea.sflag [#allocation4], %s179
        %s181 = sand.u32 %s44, 1
        %s182 = smul.addr %s181, 64
        %s183 = scalar_lea.vmem [#allocation3], %s182
        // Predicated region
        $region29: #{tpu_custom_call.1} parent=27 // pred_check
          %p184 = pneg %p57
        $region30: #{tpu_custom_call.1} parent=27 // pred_check_branch
          %186 = sbr.rel (%p184) target = $region32
        $region31: #{tpu_custom_call.1} parent=27 // pred_region
          %187 = dma.done %s180, 1024
        $region32: #{tpu_custom_call.1} parent=27 // pred_fallthru
          _
        %s188 = sand.u32 %s72, 1
        %s189 = scalar_lea.sflag [#allocation7], %s188
        %s190 = sand.u32 %s72, 1
        %s191 = smul.addr %s190, 64
        %s192 = scalar_lea.vmem [#allocation6], %s191
        // Predicated region
        $region33: #{tpu_custom_call.1} parent=27 // pred_check
          %p193 = pneg %p85
        $region34: #{tpu_custom_call.1} parent=27 // pred_check_branch
          %195 = sbr.rel (%p193) target = $region36
        $region35: #{tpu_custom_call.1} parent=27 // pred_region
          %196 = dma.done %s189, 1024
        $region36: #{tpu_custom_call.1} parent=27 // pred_fallthru
          _
        %s197 = sand.u32 %s44, 1
        %s198 = scalar_lea.sflag [#allocation4], %s197
        %s199 = sand.u32 %s44, 1
        %s200 = smul.addr %s199, 64
        %s201 = scalar_lea.vmem [#allocation3], %s200
        %p202 = pneg %p57
        %p203 = pneg %p54
        %s204 = sand.u32 %s72, 1
        %s205 = scalar_lea.sflag [#allocation7], %s204
        %s206 = sand.u32 %s72, 1
        %s207 = smul.addr %s206, 64
        %s208 = scalar_lea.vmem [#allocation6], %s207
        %p209 = pneg %p85
        %p210 = pneg %p82
        %p211 = pneg %p111
        %p212 = pneg %p108
        %s213 = sand.u32 %s98, 1
        %s214 = scalar_lea.sflag [#allocation5], %s213
        %s215 = sand.u32 %s98, 1
        %s216 = scalar_lea.vmem [#allocation8], %s215
        %s217 = sadd.s32 %s26, %s27
        %s218 = sadd.s32 %s26, %s27
        %p219 = scmp.eq.s32.totalorder %s27, 0
        // Predicated region
        $region37: #{tpu_custom_call.1} parent=27 // pred_check
          %p220 = pneg %p219
        $region38: #{tpu_custom_call.1} parent=27 // pred_check_branch
          %222 = sbr.rel (%p220) target = $region40
        $region39: #{tpu_custom_call.1} parent=27 // pred_region
          %223 = vst [vmem:[#allocation2] sm:$0xff] 0.0
          %224 = vst [vmem:[#allocation2 + $0x8] sm:$0xff] 0.0
          %225 = vst [vmem:[#allocation2 + $0x10] sm:$0xff] 0.0
          %226 = vst [vmem:[#allocation2 + $0x18] sm:$0xff] 0.0
          %227 = vst [vmem:[#allocation2 + $0x20] sm:$0xff] 0.0
          %228 = vst [vmem:[#allocation2 + $0x28] sm:$0xff] 0.0
        $region40: #{tpu_custom_call.1} parent=27 // pred_fallthru
          _
        %v229 = vlaneseq
        %v230 = vshrl.u32 %v229, 7
        %v231 = vlaneseq
        %v232 = vand.u32 %v231, 127
        %s233 = sadd.s32 %s26, %s27
        %s234 = smul.u32 %s233, 128
        %v235 = vmul.u32 %v230, 256
        %v236 = vstv %s234
        %v237 = vadd.s32 %v235, %v236
        %v238 = vadd.s32 %v237, %v232
        %vm239 = vcmp.lt.s32.totalorder %v238, 64
        %s240 = scalar_lea.vmem %s192, 32 [#allocation6]
        %v241 = vld [vmem:[%s240] sm:$0xff]
        %s242 = scalar_lea.vmem %s183, 32 [#allocation3]
        %v243 = vld [vmem:[%s242] sm:$0xff]
        %v244 = vsel %vm239, %v241, -1.0
        %v245 = vsel %vm239, %v243, 0.0
        %vm246 = vcmp.eq.f32.partialorder %v244, 1.0
        %v247 = vsel %vm246, 1, 0
        %v248 = vcvt.s32.f32 %v247
        %vm249 = vcmp.eq.f32.partialorder %v244, 0.0
        %v250 = vsel %vm249, 1, 0
        %v251 = vcvt.s32.f32 %v250
        %v252 = vmax.f32 %v245, 0.0
        %v253 = vmul.f32 %v245, %v244
        %v254 = vsub.f32 %v252, %v253
        %v255 = vand.u32 2147483647, %v245
        %v256 = vsub.f32 0.0, %v255
        %v257 = vmul.f32 %v256, 1.442695
        %v258 = vpow.pop %v257
        %v259 = vadd.f32 %v258, 1.0
        %v260 = vlog2.pop %v259
        %v261 = vmul.f32 %v260, 0.6931472
        %v262 = vadd.f32 %v254, %v261
        %v263 = vld [vmem:[#allocation2] sm:$0xff]
        %v264 = vmul.f32 %v251, %v262
        %v265 = vadd.f32 %v263, %v264
        %266 = vst [vmem:[#allocation2] sm:$0xff] %v265
        %s267 = scalar_lea.vmem [#allocation2], 8
        %v268 = vld [vmem:[%s267] sm:$0xff]
        %v269 = vmul.f32 %v248, %v262
        %v270 = vadd.f32 %v268, %v269
        %271 = vst [vmem:[%s267] sm:$0xff] %v270
        %s272 = scalar_lea.vmem [#allocation2], 16
        %v273 = vld [vmem:[%s272] sm:$0xff]
        %v274 = vadd.f32 %v273, %v251
        %275 = vst [vmem:[%s272] sm:$0xff] %v274
        %s276 = scalar_lea.vmem [#allocation2], 24
        %v277 = vld [vmem:[%s276] sm:$0xff]
        %v278 = vadd.f32 %v277, %v248
        %279 = vst [vmem:[%s276] sm:$0xff] %v278
        %v280 = vld [vmem:[%s183] sm:$0xff]
        %v281 = vld [vmem:[%s183 + $0x8] sm:$0xff]
        %vm282 = vcmp.eq.s32.totalorder %v247, 1
        %v283 = vsel %vm282, %v280, 0.0
        %v284 = vsel %vm282, %v281, 0.0
        %s285 = scalar_lea.vmem %s183, 16 [#allocation3]
        %v286 = vld [vmem:[%s285] sm:$0xff]
        %v287 = vld [vmem:[%s285 + $0x8] sm:$0xff]
        %v288 = vsel %vm282, %v286, 0.0
        %v289 = vsel %vm282, %v287, 0.0
        %v290 = vld [vmem:[%s192] sm:$0xff]
        %v291 = vld [vmem:[%s192 + $0x8] sm:$0xff]
        %v292 = vsel %vm282, %v290, 0.0
        %v293 = vsel %vm282, %v291, 0.0
        %s294 = scalar_lea.vmem %s192, 16 [#allocation6]
        %v295 = vld [vmem:[%s294] sm:$0xff]
        %v296 = vld [vmem:[%s294 + $0x8] sm:$0xff]
        %v297 = vsel %vm282, %v295, 0.0
        %v298 = vsel %vm282, %v296, 0.0
        %v299 = vxor.u32 %v283, 2147483648
        %v300 = vxor.u32 %v284, 2147483648
        %v301 = vmul.f32 %v299, 1.442695
        %v302 = vpow.pop %v301
        %v303 = vmul.f32 %v300, 1.442695
        %v304 = vpow.pop %v303
        %v305 = vadd.f32 %v302, 1.0
        %v306 = vadd.f32 %v304, 1.0
        %v307 = vrcp.pop %v305
        %v308 = vmul.f32 1.0, %v307
        %v309 = vrcp.pop %v306
        %v310 = vmul.f32 1.0, %v309
        %v311 = vsub.f32 %v308, %v292
        %v312 = vsub.f32 %v310, %v293
        %v313 = vmul.f32 %v311, %v311
        %v314 = vmul.f32 %v312, %v312
        %v315 = vmul.f32 %v288, 1.442695
        %v316 = vpow.pop %v315
        %v317 = vmul.f32 %v289, 1.442695
        %v318 = vpow.pop %v317
        %v319 = vsub.f32 %v316, %v297
        %v320 = vsub.f32 %v318, %v298
        %v321 = vmul.f32 %v319, %v319
        %v322 = vmul.f32 %v320, %v320
        %v323 = vadd.f32 %v313, %v321
        %v324 = vadd.f32 %v314, %v322
        %s325 = scalar_lea.vmem [#allocation2], 32
        %v326 = vld [vmem:[%s325] sm:$0xff]
        %v327 = vadd.f32 %v323, %v324
        %v328 = vmul.f32 %v248, %v327
        %v329 = vadd.f32 %v326, %v328
        %330 = vst [vmem:[%s325] sm:$0xff] %v329
        %s331 = scalar_lea.vmem %s183, 40 [#allocation3]
        %v332 = vld [vmem:[%s331] sm:$0xff]
        %v333 = vld [vmem:[%s331 + $0x8] sm:$0xff]
        %v334 = vld [vmem:[%s331 + $0x10] sm:$0xff]
        %v335 = vsel %vm282, %v332, 0.0
        %v336 = vsel %vm282, %v333, 0.0
        %v337 = vsel %vm282, %v334, 0.0
        %s338 = scalar_lea.vmem %s192, 40 [#allocation6]
        %v339 = vld [vmem:[%s338] sm:$0xff]
        %v340 = vld [vmem:[%s338 + $0x8] sm:$0xff]
        %v341 = vld [vmem:[%s338 + $0x10] sm:$0xff]
        %v342 = vsel %vm282, %v339, 0.0
        %v343 = vsel %vm282, %v340, 0.0
        %v344 = vsel %vm282, %v341, 0.0
        %v345 = vmax.f32 %v335, %v336
        %v346 = vmax.f32 %v345, %v337
        %v347 = vsub.f32 %v335, %v346
        %v348 = vsub.f32 %v336, %v346
        %v349 = vsub.f32 %v337, %v346
        %v350 = vmul.f32 %v347, 1.442695
        %v351 = vpow.pop %v350
        %v352 = vmul.f32 %v348, 1.442695
        %v353 = vpow.pop %v352
        %v354 = vmul.f32 %v349, 1.442695
        %v355 = vpow.pop %v354
        %v356 = vadd.f32 %v351, %v353
        %v357 = vadd.f32 %v356, %v355
        %v358 = vlog2.pop %v357
        %v359 = vmul.f32 %v358, 0.6931472
        %v360 = vadd.f32 %v346, %v359
        %s361 = scalar_lea.vmem [#allocation2], 40
        %v362 = vld [vmem:[%s361] sm:$0xff]
        %v363 = vsub.f32 %v360, %v335
        %v364 = vsub.f32 %v360, %v336
        %v365 = vsub.f32 %v360, %v337
        %v366 = vmul.f32 %v342, %v363
        %v367 = vmul.f32 %v343, %v364
        %v368 = vmul.f32 %v344, %v365
        %v369 = vadd.f32 %v366, %v367
        %v370 = vadd.f32 %v369, %v368
        %v371 = vmul.f32 %v248, %v370
        %v372 = vadd.f32 %v362, %v371
        %373 = vst [vmem:[%s361] sm:$0xff] %v372
        // Predicated region
        $region41: #{tpu_custom_call.1} parent=27 // pred_check
          %p374 = pneg %p219
        $region42: #{tpu_custom_call.1} parent=27 // pred_check_branch
          %376 = sbr.rel (%p374) target = $region44
        $region43: #{tpu_custom_call.1} parent=27 // pred_region
          %v377 = vld [vmem:[#allocation2] sm:$0xff]
          %378 = vadd.xlane.f32.xlu0 %v377
          %v379 = vpop.xlane.xlu0 %378
          %v380 = vrot.slane %v379, 4
          %v381 = vadd.f32 %v379, %v380
          %v382 = vrot.slane %v381, 2
          %v383 = vadd.f32 %v381, %v382
          %v384 = vrot.slane %v383, 1
          %v385 = vadd.f32 %v383, %v384
          %s386 = vtos %v385
          %vm387 = vcmp.eq.s32.totalorder %v232, 0
          %v388 = vstv %s386
          %v389 = vsel %vm387, %v388, 0.0
          %v390 = vadd.f32 %v389, 0.0
          %v391 = vld [vmem:[%s267] sm:$0xff]
          %392 = vadd.xlane.f32.xlu0 %v391
          %v393 = vpop.xlane.xlu0 %392
          %v394 = vrot.slane %v393, 4
          %v395 = vadd.f32 %v393, %v394
          %v396 = vrot.slane %v395, 2
          %v397 = vadd.f32 %v395, %v396
          %v398 = vrot.slane %v397, 1
          %v399 = vadd.f32 %v397, %v398
          %s400 = vtos %v399
          %vm401 = vcmp.eq.s32.totalorder %v232, 1
          %v402 = vstv %s400
          %v403 = vsel %vm401, %v402, 0.0
          %v404 = vadd.f32 %v390, %v403
          %v405 = vld [vmem:[%s272] sm:$0xff]
          %406 = vadd.xlane.f32.xlu0 %v405
          %v407 = vpop.xlane.xlu0 %406
          %v408 = vrot.slane %v407, 4
          %v409 = vadd.f32 %v407, %v408
          %v410 = vrot.slane %v409, 2
          %v411 = vadd.f32 %v409, %v410
          %v412 = vrot.slane %v411, 1
          %v413 = vadd.f32 %v411, %v412
          %s414 = vtos %v413
          %vm415 = vcmp.eq.s32.totalorder %v232, 2
          %v416 = vstv %s414
          %v417 = vsel %vm415, %v416, 0.0
          %v418 = vadd.f32 %v404, %v417
          %v419 = vld [vmem:[%s276] sm:$0xff]
          %420 = vadd.xlane.f32.xlu0 %v419
          %v421 = vpop.xlane.xlu0 %420
          %v422 = vrot.slane %v421, 4
          %v423 = vadd.f32 %v421, %v422
          %v424 = vrot.slane %v423, 2
          %v425 = vadd.f32 %v423, %v424
          %v426 = vrot.slane %v425, 1
          %v427 = vadd.f32 %v425, %v426
          %s428 = vtos %v427
          %vm429 = vcmp.eq.s32.totalorder %v232, 3
          %v430 = vstv %s428
          %v431 = vsel %vm429, %v430, 0.0
          %v432 = vadd.f32 %v418, %v431
          %v433 = vld [vmem:[%s325] sm:$0xff]
          %434 = vadd.xlane.f32.xlu0 %v433
          %v435 = vpop.xlane.xlu0 %434
          %v436 = vrot.slane %v435, 4
          %v437 = vadd.f32 %v435, %v436
          %v438 = vrot.slane %v437, 2
          %v439 = vadd.f32 %v437, %v438
          %v440 = vrot.slane %v439, 1
          %v441 = vadd.f32 %v439, %v440
          %s442 = vtos %v441
          %vm443 = vcmp.eq.s32.totalorder %v232, 4
          %v444 = vstv %s442
          %v445 = vsel %vm443, %v444, 0.0
          %v446 = vadd.f32 %v432, %v445
          %v447 = vld [vmem:[%s361] sm:$0xff]
          %448 = vadd.xlane.f32.xlu0 %v447
          %v449 = vpop.xlane.xlu0 %448
          %v450 = vrot.slane %v449, 4
          %v451 = vadd.f32 %v449, %v450
          %v452 = vrot.slane %v451, 2
          %v453 = vadd.f32 %v451, %v452
          %v454 = vrot.slane %v453, 1
          %v455 = vadd.f32 %v453, %v454
          %s456 = vtos %v455
          %vm457 = vcmp.eq.s32.totalorder %v232, 5
          %v458 = vstv %s456
          %v459 = vsel %vm457, %v458, 0.0
          %v460 = vadd.f32 %v446, %v459
          %461 = vst [vmem:[%s216] sm:$0x1] %v460
        $region44: #{tpu_custom_call.1} parent=27 // pred_fallthru
          _
        %s462 = sand.u32 %s98, 1
        %s463 = scalar_lea.sflag [#allocation5], %s462
        %s464 = sand.u32 %s98, 1
        %s465 = scalar_lea.vmem [#allocation8], %s464
        // Predicated region
        $region45: #{tpu_custom_call.1} parent=27 // pred_check
          %p466 = pneg %p108
        $region46: #{tpu_custom_call.1} parent=27 // pred_check_branch
          %468 = sbr.rel (%p466) target = $region48
        $region47: #{tpu_custom_call.1} parent=27 // pred_region
          %s470 = ssub.s32 16, 16
          %471 = vsyncadd %s463, %s470
          %s472 = smul.addr %s26, 16
          %s473 = scalar_lea.hbm %s2, %s472
          %s475 = sshll.u32 %s465, 4
          %s476 = int_to_ptr.vmem [resolvable:$true] %s475
          %478 = dma.vmem_to_hbm [thread:$0]  %s476, 16, %s473, %s463
        $region48: #{tpu_custom_call.1} parent=27 // pred_fallthru
          _
      $region28: #{tpu_custom_call.1} parent=5 // pred_fallthru
        _
      %p479 = scmp.le.s32.totalorder 2, %s17
      // Predicated region
      $region49: #{tpu_custom_call.1} parent=5 // pred_check
        %p480 = pneg %p479
      $region50: #{tpu_custom_call.1} parent=5 // pred_check_branch
        %482 = sbr.rel (%p480) target = $region52
      $region51: #{tpu_custom_call.1} parent=5 // pred_region
        %s483 = ssub.s32 %s17, 2
        // Predicated region
        $region53: #{tpu_custom_call.1} parent=51 // pred_check
          %p484 = pneg %p114
        $region54: #{tpu_custom_call.1} parent=51 // pred_check_branch
          %486 = sbr.rel (%p484) target = $region56
        $region55: #{tpu_custom_call.1} parent=51 // pred_region
          %s487 = sand.u32 %s99, 1
          %s488 = scalar_lea.sflag [#allocation5], %s487
          %s489 = sand.u32 %s99, 1
          %s490 = scalar_lea.vmem [#allocation8], %s489
          %491 = dma.done %s488, 16
        $region56: #{tpu_custom_call.1} parent=51 // pred_fallthru
          _
      $region52: #{tpu_custom_call.1} parent=5 // pred_fallthru
        _
    $region6: #{tpu_custom_call.1} parent=1 // loop_footer
      %s21 = sadd.s32 1, %s17
    $region7: #{tpu_custom_call.1} parent=1 // loop_footer_branch
      %16 = sbr.rel target = $region3
    $region8: #{tpu_custom_call.1} parent=1 // loop_exit
      _
    %492 = vsyncpa [#allocation4], 1
    %s493 = scalar_lea.sflag [#allocation4], 1
    %494 = vsyncpa %s493, 1
    %495 = vsyncpa [#allocation7], 1
    %s496 = scalar_lea.sflag [#allocation7], 1
    %497 = vsyncpa %s496, 1
    %498 = vsyncpa [#allocation5], 1
    %s499 = scalar_lea.sflag [#allocation5], 1
    %500 = vsyncpa %s499, 1

</llo_original>
